<compile_context>
chip_gen: v6e
topology: v6e:2x2x1
jax: 0.10.0
libtpu: 0.0.40
codegen_flags: <defaults>
</compile_context>

<pallas_src>
import jax
import jax.numpy as jnp
from jax.experimental import pallas as pl
from jax.experimental.pallas import tpu as pltpu


MASK_FILL = -9000000000000000.0      # same constant as the torch model


def att_kernel(x_ref, mask_ref, wqkv_ref, bqkv_ref, wo_ref, bo_ref, out_ref):
    bt, n, _ = mask_ref.shape
    hid_p = wo_ref.shape[0]

    # Fused QKV projection on the (already flattened) (bt*n, din) row block.
    qkv = jnp.dot(x_ref[...], wqkv_ref[...], preferred_element_type=jnp.float32)
    qkv = jnp.maximum(qkv + bqkv_ref[...], 0.0)             # relu(x W + b), f32

    # hid_p is a multiple of 128, so these slices land on lane-block
    # boundaries (free views, no cross-lane relayout).
    q = qkv[:, 0 * hid_p:1 * hid_p].reshape(bt, n, hid_p)
    k = qkv[:, 1 * hid_p:2 * hid_p].reshape(bt, n, hid_p)
    v = qkv[:, 2 * hid_p:3 * hid_p].reshape(bt, n, hid_p)

    # scores[b] = q[b] @ k[b].T -- contract last axes, batch over axis 0
    # (no transposed k is materialised).
    scores = jax.lax.dot_general(
        q, k, dimension_numbers=(((2,), (2,)), ((0,), (0,))),
        preferred_element_type=jnp.float32)                  # (bt, n, n)

    # Masked fill.  mask is binary {0,1}, so
    # where(mask != 0, s, -9e15) == s*mask - 9e15*(1-mask) from the torch model.
    scores = jnp.where(mask_ref[...] != 0, scores, MASK_FILL)

    # Numerically-stable softmax over the last axis.  After max-subtraction
    # the denominator is >= 1 (including fully-masked rows, which degrade to
    # uniform attention exactly like the torch -9e15 fill), so the approx
    # (EUP-slot) reciprocal is safe.
    scores = scores - jnp.max(scores, axis=-1, keepdims=True)
    e = jnp.exp(scores)
    att = e * pl.reciprocal(jnp.sum(e, axis=-1, keepdims=True), approx=True)

    # out = relu((att @ v) @ Wo + bo); output block stays 2-D and lane-dense.
    o = jax.lax.dot_general(
        att, v, dimension_numbers=(((2,), (1,)), ((0,), (0,))),
        preferred_element_type=jnp.float32)                  # (bt, n, hid_p)
    o2d = o.reshape(bt * n, hid_p).astype(wo_ref.dtype)
    out = jnp.dot(o2d, wo_ref[...], preferred_element_type=jnp.float32)
    out_ref[...] = jnp.maximum(out + bo_ref[...], 0.0).astype(out_ref.dtype)


def _round_up(x, m):
    return ((x + m - 1) // m) * m


def _tpu_generation():
    """Best-effort (vmem_budget_bytes, num_tensorcores, vmem_limit_cap).

    Single-TC parts (v5e / v6e) get the full 128 MiB budget and no forced
    grid split; v7x / unknown parts get the conservative 64 MiB-per-TC
    budget and keep >= 2 grid steps so the 'parallel' axis can be sharded.
    """
    kind = ""
    try:
        kind = jax.devices()[0].device_kind.lower()
    except Exception:
        pass
    single_tc = any(t in kind for t in
                    ("v5e", "v5 lite", "v5lite", "v6e", "v6 lite", "v6lite"))
    if single_tc:
        return 128 * 1024 * 1024, 1, 100 * 1024 * 1024
    return 64 * 1024 * 1024, 2, 48 * 1024 * 1024


def _pick_batch_tile(b, n, step_bytes_fn, vmem_budget, num_cores,
                     target_rows=2048):
    """Largest divisor bt of b such that (a) the flattened row block bt*n is
    sublane-aligned (or bt == b, i.e. full-array blocks), (b) the grid keeps
    >= num_cores steps when the chip has multiple TensorCores, and (c) the
    per-step VMEM footprint stays inside the generation's budget."""
    candidates = [bt for bt in range(1, b + 1)
                  if b % bt == 0 and ((bt * n) % 8 == 0 or bt == b)]
    feasible = []
    for bt in candidates:
        if num_cores > 1 and b >= num_cores and (b // bt) < num_cores:
            continue
        if bt * n > target_rows:
            continue
        if step_bytes_fn(bt) > 0.6 * vmem_budget:
            continue
        feasible.append(bt)
    return feasible[-1] if feasible else candidates[-1]


def att_model_forward(x, mask, params, *, param_dtype=jnp.bfloat16,
                      out_dtype=jnp.float32, batch_tile=None):
    """x: (B, N, din) f32, mask: (B, N, N) binary, params: dict -> (B, N, dout)."""
    B, N, din = x.shape
    hidden = params["wq"].shape[1]
    dout = params["wo"].shape[1]

    hid_p = _round_up(hidden, 128)       # lane-aligned q/k/v slice boundaries
    dout_p = _round_up(dout, 128)        # lane-dense output stores

    def pad_cols(a, to):
        return jnp.pad(a, ((0, 0), (0, to - a.shape[1])))

    # Fused + padded QKV weights (order q | k | v).
    wqkv = jnp.concatenate(
        [pad_cols(params["wq"], hid_p),
         pad_cols(params["wk"], hid_p),
         pad_cols(params["wv"], hid_p)], axis=1).astype(param_dtype)
    bqkv = jnp.concatenate(
        [pad_cols(params["bq"], hid_p),
         pad_cols(params["bk"], hid_p),
         pad_cols(params["bv"], hid_p)], axis=1).astype(jnp.float32)
    wo = jnp.pad(params["wo"],
                 ((0, hid_p - hidden), (0, dout_p - dout))).astype(param_dtype)
    bo = pad_cols(params["bo"], dout_p).astype(jnp.float32)

    # Free metadata reshape in HBM; removes the in-kernel sublane reshape.
    x_flat = x.reshape(B * N, din).astype(param_dtype)
    # Mask is the largest HBM stream: ship it as int8 (binary {0,1} assumed).
    mask_i8 = (mask != 0).astype(jnp.int8)

    in_bytes = jnp.dtype(param_dtype).itemsize
    out_bytes = jnp.dtype(out_dtype).itemsize
    w_bytes = (din * 3 * hid_p * in_bytes + 3 * hid_p * 4 +
               hid_p * dout_p * in_bytes + dout_p * 4)

    def step_bytes(bt):
        rows = bt * N
        io = rows * din * in_bytes + bt * N * N + rows * dout_p * out_bytes
        # f32 temporaries the body materialises (qkv, scores/att, o, out).
        tmp = (rows * 3 * hid_p * 4 + 2 * bt * N * N * 4 +
               rows * hid_p * 4 + rows * dout_p * 4)
        return 2 * (io + w_bytes) + tmp          # x2: double-buffered pipeline

    vmem_budget, num_cores, vmem_cap = _tpu_generation()
    bt = batch_tile or _pick_batch_tile(B, N, step_bytes, vmem_budget,
                                        num_cores)
    grid = (B // bt,)
    vmem_limit = int(min(vmem_cap,
                         max(32 * 1024 * 1024, int(1.5 * step_bytes(bt)))))

    out_flat = pl.pallas_call(
        att_kernel,
        out_shape=jax.ShapeDtypeStruct((B * N, dout_p), out_dtype),
        grid_spec=pltpu.PrefetchScalarGridSpec(
            num_scalar_prefetch=0,
            grid=grid,
            in_specs=[
                pl.BlockSpec((bt * N, din), lambda b: (b, 0)),      # x (flat)
                pl.BlockSpec((bt, N, N), lambda b: (b, 0, 0)),      # mask (int8)
                pl.BlockSpec((din, 3 * hid_p), lambda b: (0, 0)),   # Wqkv
                pl.BlockSpec((1, 3 * hid_p), lambda b: (0, 0)),     # bqkv
                pl.BlockSpec((hid_p, dout_p), lambda b: (0, 0)),    # Wo
                pl.BlockSpec((1, dout_p), lambda b: (0, 0)),        # bo
            ],
            out_specs=pl.BlockSpec((bt * N, dout_p), lambda b: (b, 0)),
        ),
        compiler_params=pltpu.CompilerParams(
            dimension_semantics=("parallel",),
            vmem_limit_bytes=vmem_limit,
        ),
    )(x_flat, mask_i8, wqkv, bqkv, wo, bo)

    out = out_flat.reshape(B, N, dout_p)
    return out[..., :dout] if dout_p != dout else out


def init_params(key, din, hidden_dim, dout):
    ks = jax.random.split(key, 8)
    scale_in = 1.0 / jnp.sqrt(din)
    scale_h = 1.0 / jnp.sqrt(hidden_dim)
    return {
        "wv": jax.random.uniform(ks[0], (din, hidden_dim), jnp.float32, -scale_in, scale_in),
        "bv": jax.random.uniform(ks[1], (1, hidden_dim), jnp.float32, -scale_in, scale_in),
        "wq": jax.random.uniform(ks[2], (din, hidden_dim), jnp.float32, -scale_in, scale_in),
        "bq": jax.random.uniform(ks[3], (1, hidden_dim), jnp.float32, -scale_in, scale_in),
        "wk": jax.random.uniform(ks[4], (din, hidden_dim), jnp.float32, -scale_in, scale_in),
        "bk": jax.random.uniform(ks[5], (1, hidden_dim), jnp.float32, -scale_in, scale_in),
        "wo": jax.random.uniform(ks[6], (hidden_dim, dout), jnp.float32, -scale_h, scale_h),
        "bo": jax.random.uniform(ks[7], (1, dout), jnp.float32, -scale_h, scale_h),
    }


def att_model_reference(x, mask, params, param_dtype=jnp.bfloat16):
    """Pure-JAX reference (f32 math on the same bf16-rounded weights the
    kernel consumes); semantics match the torch model."""
    f32 = jnp.float32
    xq = x.astype(param_dtype).astype(f32)

    def proj(w, b):
        w = w.astype(param_dtype).astype(f32)
        return jnp.maximum(jnp.einsum("bnd,dh->bnh", xq, w) + b, 0.0)

    q = proj(params["wq"], params["bq"])
    k = proj(params["wk"], params["bk"])
    v = proj(params["wv"], params["bv"])
    scores = jnp.einsum("bqd,bkd->bqk", q, k)
    scores = scores * mask - 9000000000000000.0 * (1.0 - mask)
    att = jax.nn.softmax(scores, axis=-1)
    o = jnp.einsum("bqk,bkd->bqd", att, v)
    wo = params["wo"].astype(param_dtype).astype(f32)
    return jnp.maximum(jnp.einsum("bnh,hd->bnd", o, wo) + params["bo"], 0.0)


if __name__ == "__main__":
    # Small shapes consistent with the module: n_node=8, din=32, hidden=32, dout=32
    B, N, DIN, HID, DOUT = 2, 8, 32, 32, 32

    key = jax.random.PRNGKey(0)
    k_x, k_m, k_p = jax.random.split(key, 3)

    x = jax.random.normal(k_x, (B, N, DIN), dtype=jnp.float32)
    # Binary adjacency-style mask with forced self-connections on the diagonal.
    mask = (jax.random.uniform(k_m, (B, N, N)) > 0.5).astype(jnp.float32)
    mask = jnp.maximum(mask, jnp.eye(N, dtype=jnp.float32)[None])

    params = init_params(k_p, DIN, HID, DOUT)

    out = att_model_forward(x, mask, params)
    jax.block_until_ready(out)

    assert out.shape == (B, N, DOUT)
    ref = att_model_reference(x, mask, params)
    err = float(jnp.max(jnp.abs(out - ref)))
    assert err < 5e-2, f"max abs error {err}"
    print("KERNEL_OK")
</pallas_src>

<mosaic_0001>
module attributes {stable_mosaic.version = 11 : i64} {
  func.func @att_kernel(%arg0: i32, %arg1: memref<8x32xbf16, #tpu.memory_space<vmem>>, %arg2: memref<1x8x8xi8, #tpu.memory_space<vmem>>, %arg3: memref<32x384xbf16, #tpu.memory_space<vmem>>, %arg4: memref<1x384xf32, #tpu.memory_space<vmem>>, %arg5: memref<128x128xbf16, #tpu.memory_space<vmem>>, %arg6: memref<1x128xf32, #tpu.memory_space<vmem>>, %arg7: memref<8x128xf32, #tpu.memory_space<vmem>>) attributes {dimension_semantics = [#tpu.dimension_semantics<parallel>], iteration_bounds = array<i64: 2>, scalar_prefetch = 0 : i64, scratch_operands = 0 : i64, tpu.core_type = #tpu.core_type<tc>, window_params = [{transform_indices = @transform_0, window_bounds = array<i64: 8, 32>}, {transform_indices = @transform_1, window_bounds = array<i64: 1, 8, 8>}, {pipeline_mode = #tpu.pipeline_mode<synchronous>, transform_indices = @transform_2, window_bounds = array<i64: 32, 384>}, {pipeline_mode = #tpu.pipeline_mode<synchronous>, transform_indices = @transform_3, window_bounds = array<i64: 1, 384>}, {pipeline_mode = #tpu.pipeline_mode<synchronous>, transform_indices = @transform_4, window_bounds = array<i64: 128, 128>}, {pipeline_mode = #tpu.pipeline_mode<synchronous>, transform_indices = @transform_5, window_bounds = array<i64: 1, 128>}, {transform_indices = @transform_6, window_bounds = array<i64: 8, 128>}]} {
    %c0 = arith.constant 0 : index
    %c0_0 = arith.constant 0 : index
    %0 = vector.load %arg1[%c0, %c0_0] : memref<8x32xbf16, #tpu.memory_space<vmem>>, vector<8x32xbf16>
    %c0_1 = arith.constant 0 : index
    %c0_2 = arith.constant 0 : index
    %1 = vector.load %arg3[%c0_1, %c0_2] : memref<32x384xbf16, #tpu.memory_space<vmem>>, vector<32x384xbf16>
    %cst = arith.constant dense<0.000000e+00> : vector<8x384xf32>
    %2 = tpu.matmul %0, %1, %cst {dimension_numbers = #tpu.dot_dimension_numbers<[1], [0], [0], [1], [0, 0, 1, 1], [], []>} : vector<8x32xbf16>, vector<32x384xbf16>, vector<8x384xf32> -> vector<8x384xf32>
    %c0_3 = arith.constant 0 : index
    %c0_4 = arith.constant 0 : index
    %3 = vector.load %arg4[%c0_3, %c0_4] : memref<1x384xf32, #tpu.memory_space<vmem>>, vector<1x384xf32>
    %4 = vector.broadcast %3 : vector<1x384xf32> to vector<8x384xf32>
    %5 = arith.addf %2, %4 : vector<8x384xf32>
    %cst_5 = arith.constant 0.000000e+00 : f32
    %6 = vector.broadcast %cst_5 : f32 to vector<8x384xf32>
    %7 = arith.maximumf %5, %6 : vector<8x384xf32>
    %8 = vector.extract_strided_slice %7 {offsets = [0, 0], sizes = [8, 128], strides = [1, 1]} : vector<8x384xf32> to vector<8x128xf32>
    %9 = vector.shape_cast %8 : vector<8x128xf32> to vector<1x8x128xf32>
    %10 = vector.extract_strided_slice %7 {offsets = [0, 128], sizes = [8, 128], strides = [1, 1]} : vector<8x384xf32> to vector<8x128xf32>
    %11 = vector.shape_cast %10 : vector<8x128xf32> to vector<1x8x128xf32>
    %12 = vector.extract_strided_slice %7 {offsets = [0, 256], sizes = [8, 128], strides = [1, 1]} : vector<8x384xf32> to vector<8x128xf32>
    %13 = vector.shape_cast %12 : vector<8x128xf32> to vector<1x8x128xf32>
    %cst_6 = arith.constant dense<0.000000e+00> : vector<1x8x8xf32>
    %14 = tpu.matmul %9, %11, %cst_6 {dimension_numbers = #tpu.dot_dimension_numbers<[2], [2], [1], [1], [0, 0, 0, 1, 1, 1], [0], [0]>} : vector<1x8x128xf32>, vector<1x8x128xf32>, vector<1x8x8xf32> -> vector<1x8x8xf32>
    %c0_7 = arith.constant 0 : index
    %c0_8 = arith.constant 0 : index
    %c0_9 = arith.constant 0 : index
    %15 = vector.load %arg2[%c0_7, %c0_8, %c0_9] : memref<1x8x8xi8, #tpu.memory_space<vmem>>, vector<1x8x8xi8>
    %c0_i8 = arith.constant 0 : i8
    %16 = vector.broadcast %c0_i8 : i8 to vector<1x8x8xi8>
    %17 = arith.cmpi ne, %15, %16 : vector<1x8x8xi8>
    %cst_10 = arith.constant -9.000000e+15 : f32
    %18 = vector.broadcast %cst_10 : f32 to vector<1x8x8xf32>
    %19 = arith.select %17, %14, %18 : vector<1x8x8xi1>, vector<1x8x8xf32>
    %cst_11 = arith.constant dense<0xFF800000> : vector<1x8xf32>
    %20 = vector.multi_reduction <maximumf>, %19, %cst_11 [2] : vector<1x8x8xf32> to vector<1x8xf32>
    %21 = vector.shape_cast %20 : vector<1x8xf32> to vector<1x8x1xf32>
    %22 = vector.broadcast %21 : vector<1x8x1xf32> to vector<1x8x8xf32>
    %23 = arith.subf %19, %22 : vector<1x8x8xf32>
    %24 = math.exp %23 : vector<1x8x8xf32>
    %cst_12 = arith.constant dense<0.000000e+00> : vector<1x8xf32>
    %25 = vector.multi_reduction <add>, %24, %cst_12 [2] : vector<1x8x8xf32> to vector<1x8xf32>
    %26 = vector.shape_cast %25 : vector<1x8xf32> to vector<1x8x1xf32>
    %27 = tpu.reciprocal %26 {approx = true} : vector<1x8x1xf32> -> vector<1x8x1xf32>
    %28 = vector.broadcast %27 : vector<1x8x1xf32> to vector<1x8x8xf32>
    %29 = arith.mulf %24, %28 : vector<1x8x8xf32>
    %cst_13 = arith.constant dense<0.000000e+00> : vector<1x8x128xf32>
    %30 = tpu.matmul %29, %13, %cst_13 {dimension_numbers = #tpu.dot_dimension_numbers<[2], [1], [1], [2], [0, 0, 0, 1, 1, 2], [0], [0]>} : vector<1x8x8xf32>, vector<1x8x128xf32>, vector<1x8x128xf32> -> vector<1x8x128xf32>
    %31 = vector.shape_cast %30 : vector<1x8x128xf32> to vector<8x128xf32>
    %32 = arith.truncf %31 : vector<8x128xf32> to vector<8x128xbf16>
    %c0_14 = arith.constant 0 : index
    %c0_15 = arith.constant 0 : index
    %33 = vector.load %arg5[%c0_14, %c0_15] : memref<128x128xbf16, #tpu.memory_space<vmem>>, vector<128x128xbf16>
    %cst_16 = arith.constant dense<0.000000e+00> : vector<8x128xf32>
    %34 = tpu.matmul %32, %33, %cst_16 {dimension_numbers = #tpu.dot_dimension_numbers<[1], [0], [0], [1], [0, 0, 1, 1], [], []>} : vector<8x128xbf16>, vector<128x128xbf16>, vector<8x128xf32> -> vector<8x128xf32>
    %c0_17 = arith.constant 0 : index
    %c0_18 = arith.constant 0 : index
    %35 = vector.load %arg6[%c0_17, %c0_18] : memref<1x128xf32, #tpu.memory_space<vmem>>, vector<1x128xf32>
    %36 = vector.broadcast %35 : vector<1x128xf32> to vector<8x128xf32>
    %37 = arith.addf %34, %36 : vector<8x128xf32>
    %cst_19 = arith.constant 0.000000e+00 : f32
    %38 = vector.broadcast %cst_19 : f32 to vector<8x128xf32>
    %39 = arith.maximumf %37, %38 : vector<8x128xf32>
    %c0_20 = arith.constant 0 : index
    %c0_21 = arith.constant 0 : index
    %40 = vector.load %arg7[%c0_20, %c0_21] : memref<8x128xf32, #tpu.memory_space<vmem>>, vector<8x128xf32>
    tpu.vector_store %arg7[%c0_20, %c0_21], %39 {strides = array<i32>} : memref<8x128xf32, #tpu.memory_space<vmem>>, vector<8x128xf32>,
    return
  }
  func.func @transform_0(%arg0: i32) -> (i32, i32) {
    %c0_i32 = arith.constant 0 : i32
    %c0_i32_0 = arith.constant 0 : i32
    return %arg0, %c0_i32 : i32, i32
  }
  func.func @transform_1(%arg0: i32) -> (i32, i32, i32) {
    %c0_i32 = arith.constant 0 : i32
    %c0_i32_0 = arith.constant 0 : i32
    %c0_i32_1 = arith.constant 0 : i32
    return %arg0, %c0_i32, %c0_i32_0 : i32, i32, i32
  }
  func.func @transform_2(%arg0: i32) -> (i32, i32) {
    %c0_i32 = arith.constant 0 : i32
    %c0_i32_0 = arith.constant 0 : i32
    %c0_i32_1 = arith.constant 0 : i32
    return %c0_i32, %c0_i32_0 : i32, i32
  }
  func.func @transform_3(%arg0: i32) -> (i32, i32) {
    %c0_i32 = arith.constant 0 : i32
    %c0_i32_0 = arith.constant 0 : i32
    %c0_i32_1 = arith.constant 0 : i32
    return %c0_i32, %c0_i32_0 : i32, i32
  }
  func.func @transform_4(%arg0: i32) -> (i32, i32) {
    %c0_i32 = arith.constant 0 : i32
    %c0_i32_0 = arith.constant 0 : i32
    %c0_i32_1 = arith.constant 0 : i32
    return %c0_i32, %c0_i32_0 : i32, i32
  }
  func.func @transform_5(%arg0: i32) -> (i32, i32) {
    %c0_i32 = arith.constant 0 : i32
    %c0_i32_0 = arith.constant 0 : i32
    %c0_i32_1 = arith.constant 0 : i32
    return %c0_i32, %c0_i32_0 : i32, i32
  }
  func.func @transform_6(%arg0: i32) -> (i32, i32) {
    %c0_i32 = arith.constant 0 : i32
    %c0_i32_0 = arith.constant 0 : i32
    return %arg0, %c0_i32 : i32, i32
  }
}

</mosaic_0001>

<llo_original>
// kernel: tpu_custom_call.1
$region0: #{tpu_custom_call.1}
  #allocation0 [shape = 'u32[]', space=smem, size = 0x4, offset = 0x4, fixed_abs, tag = 'smem constant byte address 0x4 - core index']
  #allocation1 [shape = 'u32[144,128]{1,0:T(1,128)}', space=vmem, size = 0x12000, scoped, tag = 'internal scratch']
  %s0 = inlined_call_operand.hbm [shape: bf16[16,32], index: 0, kind: input, shape index: {}]
  %s1 = inlined_call_operand.hbm [shape: s8[2,8,8], index: 1, kind: input, shape index: {}]
  %s2 = inlined_call_operand.hbm [shape: bf16[32,384], index: 2, kind: input, shape index: {}]
  %s3 = inlined_call_operand.vmem [shape: f32[1,384], index: 3, kind: input, shape index: {}]
  %s4 = inlined_call_operand.hbm [shape: bf16[128,128], index: 4, kind: input, shape index: {}]
  %s5 = inlined_call_operand.vmem [shape: f32[1,128], index: 5, kind: input, shape index: {}]
  %s6 = inlined_call_operand.hbm [shape: f32[16,128], index: 6, kind: output, shape index: {}]
  %s7 = sld [smem:[#allocation0]]
  $region73: #{tpu_custom_call.1} parent=0
    _
  %s9 = ssub.s32 1, %s7
  %s10 = scalar_select 0, %s9, %s7
  $region1: #{tpu_custom_call.1} parent=0
    #allocation2 [shape = 'u8[4096]{0}', space=vmem, size = 0x1000, scoped, tag = 'input window, operand 0']
    #allocation3 [shape = 's32[2]{0}', space=sflag, size = 0x8, scoped, tag = 'scoped memory for tpu_custom_call.1']
    #allocation4 [shape = 's32[2]{0}', space=sflag, size = 0x8, scoped, tag = 'scoped memory for tpu_custom_call.1']
    #allocation5 [shape = 'u8[2048]{0}', space=vmem, size = 0x800, scoped, tag = 'input window, operand 1']
    #allocation6 [shape = 's32[2]{0}', space=sflag, size = 0x8, scoped, tag = 'scoped memory for tpu_custom_call.1']
    #allocation7 [shape = 'u8[24576]{0}', space=vmem, size = 0x6000, scoped, tag = 'input window, operand 2, single buffered']
    #allocation8 [shape = 'u8[32768]{0}', space=vmem, size = 0x8000, scoped, tag = 'input window, operand 4, single buffered']
    #allocation9 [shape = 's32[1]{0}', space=sflag, size = 0x4, scoped, tag = 'scoped memory for tpu_custom_call.1']
    #allocation10 [shape = 'u8[8192]{0}', space=vmem, size = 0x2000, scoped, tag = 'output window, operand 0']
    %11 = vsyncpa [#allocation3], 0
    %s12 = scalar_lea.sflag [#allocation3], 1
    %13 = vsyncpa %s12, 0
    %14 = vsyncpa [#allocation6], 0
    %s15 = scalar_lea.sflag [#allocation6], 1
    %16 = vsyncpa %s15, 0
    %17 = vsyncpa [#allocation9], 0
    %18 = vsyncpa [#allocation4], 0
    %s19 = scalar_lea.sflag [#allocation4], 1
    %20 = vsyncpa %s19, 0
    loop: start=0, step=1, limit=4
    $region2: #{tpu_custom_call.1} parent=1 // loop_pre_header
      _
    $region3: #{tpu_custom_call.1} parent=1 // loop_header
      %s22 = sphi 0, %s26
      %p23 = scmp.ge.s32.totalorder %s22, 4
      %s32 = sphi 0, %s34
      %s35 = sphi 0, %s32
      %s36 = sphi 0, %s35
      %s52 = sphi 0, %s36
      %s58 = sphi 0, %s60
      %s61 = sphi 0, %s58
      %s62 = sphi 0, %s61
      %s78 = sphi 0, %s62
      %s82 = sphi 0, %s82
      %s84 = sphi 0, %s82
      %s85 = sphi 0, %s84
      %s99 = sphi 0, %s85
      %s103 = sphi 0, %s103
      %s105 = sphi 0, %s103
      %s106 = sphi 0, %s105
      %s120 = sphi 0, %s106
      %s124 = sphi 0, %s124
      %s126 = sphi 0, %s124
      %s127 = sphi 0, %s126
      %s141 = sphi 0, %s127
      %s145 = sphi 0, %s145
      %s147 = sphi 0, %s145
      %s148 = sphi 0, %s147
      %s162 = sphi 0, %s148
      %s168 = sphi 0, %s170
      %s171 = sphi 0, %s168
      %s172 = sphi 0, %s171
      %s188 = sphi 0, %s172
    $region4: #{tpu_custom_call.1} parent=1 // loop_header_branch
      %25 = sbr.rel (%p23) target = $region8
    $region5: #{tpu_custom_call.1} parent=1 // loop_body
      %s27 = ssub.s32 %s22, 1
      %s28 = ssub.s32 %s22, 2
      %s29 = sadd.s32 %s22, 1
      %s30 = ssub.s32 %s22, %s29
      %p31 = scmp.eq.s32.totalorder %s30, 0
      %s33 = sadd.s32 %s32, 1
      %s34 = scalar_select %p31, %s32, %s33
      %p37 = pneg %p31
      %p38 = scmp.eq.s32.totalorder %s22, 1
      %p39 = por %p37, %p38
      %p40 = scmp.ne.s32.totalorder %s32, %s35
      %p41 = scmp.eq.s32.totalorder %s22, 0
      %p42 = por %p40, %p41
      %p43 = scmp.ne.s32.totalorder %s32, %s35
      %p44 = scmp.eq.s32.totalorder %s27, 1
      %p45 = por %p43, %p44
      %p46 = scmp.ne.s32.totalorder %s35, %s36
      %p47 = scmp.eq.s32.totalorder %s27, 0
      %p48 = por %p46, %p47
      %p49 = scmp.ne.s32.totalorder %s35, %s36
      %p50 = scmp.eq.s32.totalorder %s28, 1
      %p51 = por %p49, %p50
      %p53 = scmp.ne.s32.totalorder %s36, %s52
      %p54 = scmp.eq.s32.totalorder %s28, 0
      %p55 = por %p53, %p54
      %s56 = ssub.s32 %s22, %s29
      %p57 = scmp.eq.s32.totalorder %s56, 0
      %s59 = sadd.s32 %s58, 1
      %s60 = scalar_select %p57, %s58, %s59
      %p63 = pneg %p57
      %p64 = scmp.eq.s32.totalorder %s22, 1
      %p65 = por %p63, %p64
      %p66 = scmp.ne.s32.totalorder %s58, %s61
      %p67 = scmp.eq.s32.totalorder %s22, 0
      %p68 = por %p66, %p67
      %p69 = scmp.ne.s32.totalorder %s58, %s61
      %p70 = scmp.eq.s32.totalorder %s27, 1
      %p71 = por %p69, %p70
      %p72 = scmp.ne.s32.totalorder %s61, %s62
      %p73 = scmp.eq.s32.totalorder %s27, 0
      %p74 = por %p72, %p73
      %p75 = scmp.ne.s32.totalorder %s61, %s62
      %p76 = scmp.eq.s32.totalorder %s28, 1
      %p77 = por %p75, %p76
      %p79 = scmp.ne.s32.totalorder %s62, %s78
      %p80 = scmp.eq.s32.totalorder %s28, 0
      %p81 = por %p79, %p80
      %s83 = sadd.s32 %s82, 1
      %p86 = scmp.eq.s32.totalorder %s22, 1
      %p87 = scmp.ne.s32.totalorder %s82, %s84
      %p88 = scmp.eq.s32.totalorder %s22, 0
      %p89 = por %p87, %p88
      %p90 = scmp.ne.s32.totalorder %s82, %s84
      %p91 = scmp.eq.s32.totalorder %s27, 1
      %p92 = por %p90, %p91
      %p93 = scmp.ne.s32.totalorder %s84, %s85
      %p94 = scmp.eq.s32.totalorder %s27, 0
      %p95 = por %p93, %p94
      %p96 = scmp.ne.s32.totalorder %s84, %s85
      %p97 = scmp.eq.s32.totalorder %s28, 1
      %p98 = por %p96, %p97
      %p100 = scmp.ne.s32.totalorder %s85, %s99
      %p101 = scmp.eq.s32.totalorder %s28, 0
      %p102 = por %p100, %p101
      %s104 = sadd.s32 %s103, 1
      %p107 = scmp.eq.s32.totalorder %s22, 1
      %p108 = scmp.ne.s32.totalorder %s103, %s105
      %p109 = scmp.eq.s32.totalorder %s22, 0
      %p110 = por %p108, %p109
      %p111 = scmp.ne.s32.totalorder %s103, %s105
      %p112 = scmp.eq.s32.totalorder %s27, 1
      %p113 = por %p111, %p112
      %p114 = scmp.ne.s32.totalorder %s105, %s106
      %p115 = scmp.eq.s32.totalorder %s27, 0
      %p116 = por %p114, %p115
      %p117 = scmp.ne.s32.totalorder %s105, %s106
      %p118 = scmp.eq.s32.totalorder %s28, 1
      %p119 = por %p117, %p118
      %p121 = scmp.ne.s32.totalorder %s106, %s120
      %p122 = scmp.eq.s32.totalorder %s28, 0
      %p123 = por %p121, %p122
      %s125 = sadd.s32 %s124, 1
      %p128 = scmp.eq.s32.totalorder %s22, 1
      %p129 = scmp.ne.s32.totalorder %s124, %s126
      %p130 = scmp.eq.s32.totalorder %s22, 0
      %p131 = por %p129, %p130
      %p132 = scmp.ne.s32.totalorder %s124, %s126
      %p133 = scmp.eq.s32.totalorder %s27, 1
      %p134 = por %p132, %p133
      %p135 = scmp.ne.s32.totalorder %s126, %s127
      %p136 = scmp.eq.s32.totalorder %s27, 0
      %p137 = por %p135, %p136
      %p138 = scmp.ne.s32.totalorder %s126, %s127
      %p139 = scmp.eq.s32.totalorder %s28, 1
      %p140 = por %p138, %p139
      %p142 = scmp.ne.s32.totalorder %s127, %s141
      %p143 = scmp.eq.s32.totalorder %s28, 0
      %p144 = por %p142, %p143
      %s146 = sadd.s32 %s145, 1
      %p149 = scmp.eq.s32.totalorder %s22, 1
      %p150 = scmp.ne.s32.totalorder %s145, %s147
      %p151 = scmp.eq.s32.totalorder %s22, 0
      %p152 = por %p150, %p151
      %p153 = scmp.ne.s32.totalorder %s145, %s147
      %p154 = scmp.eq.s32.totalorder %s27, 1
      %p155 = por %p153, %p154
      %p156 = scmp.ne.s32.totalorder %s147, %s148
      %p157 = scmp.eq.s32.totalorder %s27, 0
      %p158 = por %p156, %p157
      %p159 = scmp.ne.s32.totalorder %s147, %s148
      %p160 = scmp.eq.s32.totalorder %s28, 1
      %p161 = por %p159, %p160
      %p163 = scmp.ne.s32.totalorder %s148, %s162
      %p164 = scmp.eq.s32.totalorder %s28, 0
      %p165 = por %p163, %p164
      %s166 = ssub.s32 %s22, %s29
      %p167 = scmp.eq.s32.totalorder %s166, 0
      %s169 = sadd.s32 %s168, 1
      %s170 = scalar_select %p167, %s168, %s169
      %p173 = pneg %p167
      %p174 = scmp.eq.s32.totalorder %s22, 1
      %p175 = por %p173, %p174
      %p176 = scmp.ne.s32.totalorder %s168, %s171
      %p177 = scmp.eq.s32.totalorder %s22, 0
      %p178 = por %p176, %p177
      %p179 = scmp.ne.s32.totalorder %s168, %s171
      %p180 = scmp.eq.s32.totalorder %s27, 1
      %p181 = por %p179, %p180
      %p182 = scmp.ne.s32.totalorder %s171, %s172
      %p183 = scmp.eq.s32.totalorder %s27, 0
      %p184 = por %p182, %p183
      %p185 = scmp.ne.s32.totalorder %s171, %s172
      %p186 = scmp.eq.s32.totalorder %s28, 1
      %p187 = por %p185, %p186
      %p189 = scmp.ne.s32.totalorder %s172, %s188
      %p190 = scmp.eq.s32.totalorder %s28, 0
      %p191 = por %p189, %p190
      %p192 = scmp.le.s32.totalorder 1, %s22
      %p193 = scmp.lt.s32.totalorder %s22, 3
      %p194 = pnand %p192, %p193
      %p195 = pneg %p194
      // Predicated region
      $region9: #{tpu_custom_call.1} parent=5 // pred_check
        _
      $region10: #{tpu_custom_call.1} parent=5 // pred_check_branch
        %197 = sbr.rel (%p194) target = $region12
      $region11: #{tpu_custom_call.1} parent=5 // pred_region
        %s198 = ssub.s32 %s22, 1
        // Predicated region
        $region13: #{tpu_custom_call.1} parent=11 // pred_check
          %p199 = pneg %p95
        $region14: #{tpu_custom_call.1} parent=11 // pred_check_branch
          %201 = sbr.rel (%p199) target = $region16
        $region15: #{tpu_custom_call.1} parent=11 // pred_region
          %s203 = ssub.s32 768, 768
          %204 = vsyncadd [#allocation6], %s203
          %s205 = sshll.u32 [#allocation7], 4
          %s206 = int_to_ptr.vmem [resolvable:$true] %s205
          %211 = dma.hbm_to_vmem [thread:$0]  %s2, 768, %s206, [#allocation6], 192, 192, 12
        $region16: #{tpu_custom_call.1} parent=11 // pred_fallthru
          _
        // Predicated region
        $region17: #{tpu_custom_call.1} parent=11 // pred_check
          %p212 = pneg %p116
        $region18: #{tpu_custom_call.1} parent=11 // pred_check_branch
          %214 = sbr.rel (%p212) target = $region20
        $region19: #{tpu_custom_call.1} parent=11 // pred_region
          _
        $region20: #{tpu_custom_call.1} parent=11 // pred_fallthru
          _
        // Predicated region
        $region21: #{tpu_custom_call.1} parent=11 // pred_check
          %p215 = pneg %p137
        $region22: #{tpu_custom_call.1} parent=11 // pred_check_branch
          %217 = sbr.rel (%p215) target = $region24
        $region23: #{tpu_custom_call.1} parent=11 // pred_region
          %s219 = ssub.s32 1024, 1024
          %220 = vsyncadd [#allocation9], %s219
          %s221 = sshll.u32 [#allocation8], 4
          %s222 = int_to_ptr.vmem [resolvable:$true] %s221
          %227 = dma.hbm_to_vmem [thread:$0]  %s4, 1024, %s222, [#allocation9], 64, 64, 4
        $region24: #{tpu_custom_call.1} parent=11 // pred_fallthru
          _
        // Predicated region
        $region25: #{tpu_custom_call.1} parent=11 // pred_check
          %p228 = pneg %p158
        $region26: #{tpu_custom_call.1} parent=11 // pred_check_branch
          %230 = sbr.rel (%p228) target = $region28
        $region27: #{tpu_custom_call.1} parent=11 // pred_region
          _
        $region28: #{tpu_custom_call.1} parent=11 // pred_fallthru
          _
      $region12: #{tpu_custom_call.1} parent=5 // pred_fallthru
        _
      %p231 = scmp.lt.s32.totalorder %s22, 2
      // Predicated region
      $region29: #{tpu_custom_call.1} parent=5 // pred_check
        %p232 = pneg %p231
      $region30: #{tpu_custom_call.1} parent=5 // pred_check_branch
        %234 = sbr.rel (%p232) target = $region32
      $region31: #{tpu_custom_call.1} parent=5 // pred_region
        // Predicated region
        $region33: #{tpu_custom_call.1} parent=31 // pred_check
          %p235 = pneg %p42
        $region34: #{tpu_custom_call.1} parent=31 // pred_check_branch
          %237 = sbr.rel (%p235) target = $region36
        $region35: #{tpu_custom_call.1} parent=31 // pred_region
          %s238 = sand.u32 %s32, 1
          %s239 = scalar_lea.sflag [#allocation3], %s238
          %s240 = sand.u32 %s32, 1
          %s241 = smul.addr %s240, 4
          %s242 = scalar_lea.vmem [#allocation2], %s241
          %s244 = ssub.s32 64, 64
          %245 = vsyncadd %s239, %s244
          %s246 = smul.addr %s22, 64
          %s247 = scalar_lea.hbm %s0, %s246
          %s249 = sshll.u32 %s242, 4
          %s250 = int_to_ptr.vmem [resolvable:$true] %s249
          %252 = dma.hbm_to_vmem [thread:$0]  %s247, 64, %s250, %s239
        $region36: #{tpu_custom_call.1} parent=31 // pred_fallthru
          _
        // Predicated region
        $region37: #{tpu_custom_call.1} parent=31 // pred_check
          %p253 = pneg %p68
        $region38: #{tpu_custom_call.1} parent=31 // pred_check_branch
          %255 = sbr.rel (%p253) target = $region40
        $region39: #{tpu_custom_call.1} parent=31 // pred_region
          %s256 = sand.u32 %s22, 1
          %s257 = scalar_lea.sflag [#allocation6], %s256
          %s258 = sand.u32 %s58, 1
          %s259 = smul.addr %s258, 2
          %s260 = scalar_lea.vmem [#allocation5], %s259
          %s262 = ssub.s32 32, 32
          %263 = vsyncadd %s257, %s262
          %s264 = smul.addr %s22, 32
          %s265 = scalar_lea.hbm %s1, %s264
          %s267 = sshll.u32 %s260, 4
          %s268 = int_to_ptr.vmem [resolvable:$true] %s267
          %270 = dma.hbm_to_vmem [thread:$0]  %s265, 32, %s268, %s257
        $region40: #{tpu_custom_call.1} parent=31 // pred_fallthru
          _
      $region32: #{tpu_custom_call.1} parent=5 // pred_fallthru
        _
      %p271 = scmp.le.s32.totalorder 1, %s22
      %p272 = scmp.lt.s32.totalorder %s22, 3
      %p273 = pnand %p271, %p272
      %p274 = pneg %p273
      // Predicated region
      $region41: #{tpu_custom_call.1} parent=5 // pred_check
        _
      $region42: #{tpu_custom_call.1} parent=5 // pred_check_branch
        %276 = sbr.rel (%p273) target = $region44
      $region43: #{tpu_custom_call.1} parent=5 // pred_region
        %s277 = ssub.s32 %s22, 1
        %s278 = sand.u32 %s35, 1
        %s279 = scalar_lea.sflag [#allocation3], %s278
        %s280 = sand.u32 %s35, 1
        %s281 = smul.addr %s280, 4
        %s282 = scalar_lea.vmem [#allocation2], %s281
        // Predicated region
        $region45: #{tpu_custom_call.1} parent=43 // pred_check
          %p283 = pneg %p48
        $region46: #{tpu_custom_call.1} parent=43 // pred_check_branch
          %285 = sbr.rel (%p283) target = $region48
        $region47: #{tpu_custom_call.1} parent=43 // pred_region
          %286 = dma.done %s279, 64
        $region48: #{tpu_custom_call.1} parent=43 // pred_fallthru
          _
        %s287 = sand.u32 %s27, 1
        %s288 = scalar_lea.sflag [#allocation6], %s287
        %s289 = sand.u32 %s61, 1
        %s290 = smul.addr %s289, 2
        %s291 = scalar_lea.vmem [#allocation5], %s290
        // Predicated region
        $region49: #{tpu_custom_call.1} parent=43 // pred_check
          %p292 = pneg %p74
        $region50: #{tpu_custom_call.1} parent=43 // pred_check_branch
          %294 = sbr.rel (%p292) target = $region52
        $region51: #{tpu_custom_call.1} parent=43 // pred_region
          %295 = dma.done %s288, 32
        $region52: #{tpu_custom_call.1} parent=43 // pred_fallthru
          _
        // Predicated region
        $region53: #{tpu_custom_call.1} parent=43 // pred_check
          %p296 = pneg %p95
        $region54: #{tpu_custom_call.1} parent=43 // pred_check_branch
          %298 = sbr.rel (%p296) target = $region56
        $region55: #{tpu_custom_call.1} parent=43 // pred_region
          %299 = dma.done [#allocation6], 768
        $region56: #{tpu_custom_call.1} parent=43 // pred_fallthru
          _
        // Predicated region
        $region57: #{tpu_custom_call.1} parent=43 // pred_check
          %p300 = pneg %p137
        $region58: #{tpu_custom_call.1} parent=43 // pred_check_branch
          %302 = sbr.rel (%p300) target = $region60
        $region59: #{tpu_custom_call.1} parent=43 // pred_region
          %303 = dma.done [#allocation9], 1024
        $region60: #{tpu_custom_call.1} parent=43 // pred_fallthru
          _
        %s304 = sand.u32 %s35, 1
        %s305 = scalar_lea.sflag [#allocation3], %s304
        %s306 = sand.u32 %s35, 1
        %s307 = smul.addr %s306, 4
        %s308 = scalar_lea.vmem [#allocation2], %s307
        %p309 = pneg %p48
        %p310 = pneg %p45
        %s311 = sand.u32 %s27, 1
        %s312 = scalar_lea.sflag [#allocation6], %s311
        %s313 = sand.u32 %s61, 1
        %s314 = smul.addr %s313, 2
        %s315 = scalar_lea.vmem [#allocation5], %s314
        %p316 = pneg %p74
        %p317 = pneg %p71
        %p318 = pneg %p95
        %p319 = pneg %p92
        %p320 = pneg %p116
        %p321 = pneg %p113
        %p322 = pneg %p137
        %p323 = pneg %p134
        %p324 = pneg %p158
        %p325 = pneg %p155
        %p326 = pneg %p184
        %p327 = pneg %p181
        %s328 = sand.u32 %s171, 1
        %s329 = scalar_lea.sflag [#allocation4], %s328
        %s330 = sand.u32 %s171, 1
        %s331 = smul.addr %s330, 8
        %s332 = scalar_lea.vmem [#allocation10], %s331
        %v336 = vld [vmem:[%s282] sm:$0xf]
        %v337 = vld [vmem:[#allocation7] sm:$0xff]
        %v338 = vld [vmem:[#allocation7 + $0x8] sm:$0xf]
        %v339 = vld [vmem:[#allocation7 + $0xc] sm:$0xff]
        %v340 = vld [vmem:[#allocation7 + $0x14] sm:$0xf]
        %v341 = vld [vmem:[#allocation7 + $0x18] sm:$0xff]
        %v342 = vld [vmem:[#allocation7 + $0x20] sm:$0xf]
        %v343 = vld [vmem:[#allocation7 + $0x24] sm:$0xff]
        %v344 = vld [vmem:[#allocation7 + $0x2c] sm:$0xf]
        %v345 = vld [vmem:[%s3] sm:$0x7]
        %v347 = vlaneseq
        %v348 = vshrl.u32 %v347, 7
        %v349 = vsub.s32 0, %v348
        %v350 = vrot.slane %v345, %v349
        %v351 = vlaneseq
        %v352 = vshrl.u32 %v351, 7
        %v353 = vsub.s32 1, %v352
        %v354 = vrot.slane %v345, %v353
        %v355 = vlaneseq
        %v356 = vshrl.u32 %v355, 7
        %v357 = vsub.s32 2, %v356
        %v358 = vrot.slane %v345, %v357
        %v370 = vunpack.c.l.b16 %v337
        %v371 = vunpack.c.h.b16 %v337
        %v372 = vunpack.c.l.b16 %v338
        %v373 = vunpack.c.l.b16 %v339
        %v374 = vunpack.c.h.b16 %v339
        %v375 = vunpack.c.l.b16 %v340
        %v376 = vunpack.c.l.b16 %v341
        %v377 = vunpack.c.h.b16 %v341
        %v378 = vunpack.c.l.b16 %v342
        %v379 = vunpack.c.l.b16 %v343
        %v380 = vunpack.c.h.b16 %v343
        %v381 = vunpack.c.l.b16 %v344
        %v382 = vpack.c.b16 %v373, %v370
        %v383 = vpack.c.b16 %v374, %v371
        %v384 = vpack.c.b16 %v375, %v372
        %v385 = vpack.c.b16 %v379, %v376
        %v386 = vpack.c.b16 %v380, %v377
        %v387 = vpack.c.b16 %v381, %v378
        %vm394 = vcmask 261120
        %v396 = vsel %vm394, %v336, 0
        %398 = vmatprep.subr.bf16.mxu0 0
        %399 = vmatpush1.bf16.msra.mxu0 0
        %400 = vmatprep.subr.bf16.mxu0 0
        %401 = vmatpush1.bf16.msra.mxu0 0
        %402 = vmatprep.subr.bf16.mxu0 0
        %403 = vmatpush1.bf16.msra.mxu0 0
        %404 = vmatprep.subr.bf16.mxu0 0
        %405 = vmatpush1.bf16.msra.mxu0 0
        %406 = vmatprep.subr.bf16.mxu0 0
        %407 = vmatpush1.bf16.msra.mxu0 0
        %408 = vmatprep.subr.bf16.mxu0 0
        %409 = vmatpush1.bf16.msra.mxu0 0
        %410 = vmatprep.subr.bf16.mxu0 %v386
        %411 = vmatpush1.bf16.msra.mxu0 %v385
        %412 = vmatprep.subr.bf16.mxu0 %v383
        %413 = vmatpush1.bf16.msra.mxu0 %v382
        %414 = vmatprep.subr.bf16.mxu0 0
        %415 = vmatpush2.bf16.msra.mxu0 0
        %416 = vmatprep.subr.bf16.mxu0 0
        %417 = vmatpush2.bf16.msra.mxu0 0
        %418 = vmatprep.subr.bf16.mxu0 0
        %419 = vmatpush2.bf16.msra.mxu0 0
        %420 = vmatprep.subr.bf16.mxu0 0
        %421 = vmatpush2.bf16.msra.mxu0 0
        %422 = vmatprep.subr.bf16.mxu0 0
        %423 = vmatpush2.bf16.msra.mxu0 0
        %424 = vmatprep.subr.bf16.mxu0 0
        %425 = vmatpush2.bf16.msra.mxu0 0
        %426 = vmatprep.subr.bf16.mxu0 0
        %427 = vmatpush2.bf16.msra.mxu0 0
        %428 = vmatprep.subr.bf16.mxu0 0
        %429 = vmatpush2.bf16.msra.mxu0 0
        %430 = vmatprep.mubr.bf16.mxu0 0
        %431 = vmatmul.mubr.bf16.gmra.mxu0 %v396
        %v432 = vpop.f32.mrf.mxu0
        %v433 = vadd.f32 %v350, %v432
        %v434 = vpop.f32.mrf.mxu0
        %v435 = vadd.f32 %v354, %v434
        %v436 = vpop.f32.mrf.mxu0
        %v437 = vpop.f32.mrf.mxu0
        %438 = vdwg.mxu0
        %439 = vmatprep.subr.bf16.mxu0 0
        %440 = vmatpush1.bf16.msra.mxu0 0
        %441 = vmatprep.subr.bf16.mxu0 0
        %442 = vmatpush1.bf16.msra.mxu0 0
        %443 = vmatprep.subr.bf16.mxu0 0
        %444 = vmatpush1.bf16.msra.mxu0 0
        %445 = vmatprep.subr.bf16.mxu0 0
        %446 = vmatpush1.bf16.msra.mxu0 0
        %447 = vmatprep.subr.bf16.mxu0 0
        %448 = vmatpush1.bf16.msra.mxu0 0
        %449 = vmatprep.subr.bf16.mxu0 0
        %450 = vmatpush1.bf16.msra.mxu0 0
        %451 = vmatprep.subr.bf16.mxu0 0
        %452 = vmatpush1.bf16.msra.mxu0 %v387
        %453 = vmatprep.subr.bf16.mxu0 0
        %454 = vmatpush1.bf16.msra.mxu0 %v384
        %455 = vmatprep.subr.bf16.mxu0 0
        %456 = vmatpush2.bf16.msra.mxu0 0
        %457 = vmatprep.subr.bf16.mxu0 0
        %458 = vmatpush2.bf16.msra.mxu0 0
        %459 = vmatprep.subr.bf16.mxu0 0
        %460 = vmatpush2.bf16.msra.mxu0 0
        %461 = vmatprep.subr.bf16.mxu0 0
        %462 = vmatpush2.bf16.msra.mxu0 0
        %463 = vmatprep.subr.bf16.mxu0 0
        %464 = vmatpush2.bf16.msra.mxu0 0
        %465 = vmatprep.subr.bf16.mxu0 0
        %466 = vmatpush2.bf16.msra.mxu0 0
        %467 = vmatprep.subr.bf16.mxu0 0
        %468 = vmatpush2.bf16.msra.mxu0 0
        %469 = vmatprep.subr.bf16.mxu0 0
        %470 = vmatpush2.bf16.msra.mxu0 0
        %471 = vmatprep.mubr.bf16.mxu0 0
        %472 = vmatmul.mubr.bf16.gmra.mxu0 %v396
        %v473 = vpop.f32.mrf.mxu0
        %v474 = vadd.f32 %v358, %v473
        %v475 = vpop.f32.mrf.mxu0
        %v476 = vpop.f32.mrf.mxu0
        %v477 = vpop.f32.mrf.mxu0
        %478 = vdwg.mxu0
        %v479 = vmax.f32 %v433, 0.0
        %v480 = vmax.f32 %v435, 0.0
        %v481 = vmax.f32 %v474, 0.0
        %482 = vmatprep.subr.mxu0 0.0
        %483 = vmatpush1.xpose.msra.mxu0 0.0
        %484 = vmatprep.subr.mxu0 0.0
        %485 = vmatpush1.xpose.msra.mxu0 0.0
        %486 = vmatprep.subr.mxu0 0.0
        %487 = vmatpush1.xpose.msra.mxu0 0.0
        %488 = vmatprep.subr.mxu0 0.0
        %489 = vmatpush1.xpose.msra.mxu0 0.0
        %490 = vmatprep.subr.mxu0 0.0
        %491 = vmatpush1.xpose.msra.mxu0 0.0
        %492 = vmatprep.subr.mxu0 0.0
        %493 = vmatpush1.xpose.msra.mxu0 0.0
        %494 = vmatprep.subr.mxu0 0.0
        %495 = vmatpush1.xpose.msra.mxu0 0.0
        %496 = vmatprep.subr.mxu0 0.0
        %497 = vmatpush1.xpose.msra.mxu0 0.0
        %498 = vmatprep.subr.mxu0 0.0
        %499 = vmatpush1.xpose.msra.mxu0 0.0
        %500 = vmatprep.subr.mxu0 0.0
        %501 = vmatpush1.xpose.msra.mxu0 0.0
        %502 = vmatprep.subr.mxu0 0.0
        %503 = vmatpush1.xpose.msra.mxu0 0.0
        %504 = vmatprep.subr.mxu0 0.0
        %505 = vmatpush1.xpose.msra.mxu0 0.0
        %506 = vmatprep.subr.mxu0 0.0
        %507 = vmatpush1.xpose.msra.mxu0 0.0
        %508 = vmatprep.subr.mxu0 0.0
        %509 = vmatpush1.xpose.msra.mxu0 0.0
        %510 = vmatprep.subr.mxu0 0.0
        %511 = vmatpush1.xpose.msra.mxu0 0.0
        %512 = vmatprep.subr.mxu0 0.0
        %513 = vmatpush1.xpose.msra.mxu0 %v480
        %514 = vmatprep.subr.mxu0 0.0
        %515 = vmatpush2.xpose.msra.mxu0 0.0
        %516 = vmatprep.subr.mxu0 0.0
        %517 = vmatpush2.xpose.msra.mxu0 0.0
        %518 = vmatprep.subr.mxu0 0.0
        %519 = vmatpush2.xpose.msra.mxu0 0.0
        %520 = vmatprep.subr.mxu0 0.0
        %521 = vmatpush2.xpose.msra.mxu0 0.0
        %522 = vmatprep.subr.mxu0 0.0
        %523 = vmatpush2.xpose.msra.mxu0 0.0
        %524 = vmatprep.subr.mxu0 0.0
        %525 = vmatpush2.xpose.msra.mxu0 0.0
        %526 = vmatprep.subr.mxu0 0.0
        %527 = vmatpush2.xpose.msra.mxu0 0.0
        %528 = vmatprep.subr.mxu0 0.0
        %529 = vmatpush2.xpose.msra.mxu0 0.0
        %530 = vmatprep.subr.mxu0 0.0
        %531 = vmatpush2.xpose.msra.mxu0 0.0
        %532 = vmatprep.subr.mxu0 0.0
        %533 = vmatpush2.xpose.msra.mxu0 0.0
        %534 = vmatprep.subr.mxu0 0.0
        %535 = vmatpush2.xpose.msra.mxu0 0.0
        %536 = vmatprep.subr.mxu0 0.0
        %537 = vmatpush2.xpose.msra.mxu0 0.0
        %538 = vmatprep.subr.mxu0 0.0
        %539 = vmatpush2.xpose.msra.mxu0 0.0
        %540 = vmatprep.subr.mxu0 0.0
        %541 = vmatpush2.xpose.msra.mxu0 0.0
        %542 = vmatprep.subr.mxu0 0.0
        %543 = vmatpush2.xpose.msra.mxu0 0.0
        %544 = vmatprep.subr.mxu0 0.0
        %545 = vmatpush2.xpose.msra.mxu0 0.0
        %546 = vmatprep.mubr.f32.mxu0 0.0
        %547 = vmatmul.mubr.f32.gmra.mxu0 %v479
        %v548 = vpop.f32.mrf.mxu0
        %v549 = vadd.f32 0.0, %v548
        %v550 = vpop.f32.mrf.mxu0
        %551 = vdwg.mxu0
        %v552 = vld [vmem:[%s291] sm:$0x3]
        %vm553 = vnez %v552
        %v554 = vsel %vm553, 16843009, 0
        %v555 = vunpack.c.0.s8 %v554
        %vm556 = vcmp.ne.s32.totalorder %v555, 0
        %v557 = vsel %vm556, %v549, -9e+15
        %vm558 = vcmask 64512
        %v559 = vsel %vm558, %v557, -inf
        %560 = vmax.xlane.f32.xlu0 %v559
        %v561 = vpop.xlane.xlu0 %560
        %v562 = vsub.f32 %v557, %v561
        %v563 = vmul.f32 %v562, 1.442695
        %v564 = vpow.pop %v563
        %v565 = vsel %vm558, %v564, 0.0
        %566 = vadd.xlane.f32.xlu0 %v565
        %v567 = vpop.xlane.xlu0 %566
        %v568 = vrcp.pop %v567
        %v569 = vmul.f32 %v564, %v568
        %v571 = vsel %vm558, %v569, 0
        %573 = vmatprep.subr.mxu0 0.0
        %574 = vmatpush1.msra.mxu0 0.0
        %575 = vmatprep.subr.mxu0 0.0
        %576 = vmatpush1.msra.mxu0 0.0
        %577 = vmatprep.subr.mxu0 0.0
        %578 = vmatpush1.msra.mxu0 0.0
        %579 = vmatprep.subr.mxu0 0.0
        %580 = vmatpush1.msra.mxu0 0.0
        %581 = vmatprep.subr.mxu0 0.0
        %582 = vmatpush1.msra.mxu0 0.0
        %583 = vmatprep.subr.mxu0 0.0
        %584 = vmatpush1.msra.mxu0 0.0
        %585 = vmatprep.subr.mxu0 0.0
        %586 = vmatpush1.msra.mxu0 0.0
        %587 = vmatprep.subr.mxu0 0.0
        %588 = vmatpush1.msra.mxu0 0.0
        %589 = vmatprep.subr.mxu0 0.0
        %590 = vmatpush1.msra.mxu0 0.0
        %591 = vmatprep.subr.mxu0 0.0
        %592 = vmatpush1.msra.mxu0 0.0
        %593 = vmatprep.subr.mxu0 0.0
        %594 = vmatpush1.msra.mxu0 0.0
        %595 = vmatprep.subr.mxu0 0.0
        %596 = vmatpush1.msra.mxu0 0.0
        %597 = vmatprep.subr.mxu0 0.0
        %598 = vmatpush1.msra.mxu0 0.0
        %599 = vmatprep.subr.mxu0 0.0
        %600 = vmatpush1.msra.mxu0 0.0
        %601 = vmatprep.subr.mxu0 0.0
        %602 = vmatpush1.msra.mxu0 0.0
        %603 = vmatprep.subr.mxu0 0.0
        %604 = vmatpush1.msra.mxu0 %v481
        %605 = vmatprep.subr.mxu0 0.0
        %606 = vmatpush2.msra.mxu0 0.0
        %607 = vmatprep.subr.mxu0 0.0
        %608 = vmatpush2.msra.mxu0 0.0
        %609 = vmatprep.subr.mxu0 0.0
        %610 = vmatpush2.msra.mxu0 0.0
        %611 = vmatprep.subr.mxu0 0.0
        %612 = vmatpush2.msra.mxu0 0.0
        %613 = vmatprep.subr.mxu0 0.0
        %614 = vmatpush2.msra.mxu0 0.0
        %615 = vmatprep.subr.mxu0 0.0
        %616 = vmatpush2.msra.mxu0 0.0
        %617 = vmatprep.subr.mxu0 0.0
        %618 = vmatpush2.msra.mxu0 0.0
        %619 = vmatprep.subr.mxu0 0.0
        %620 = vmatpush2.msra.mxu0 0.0
        %621 = vmatprep.subr.mxu0 0.0
        %622 = vmatpush2.msra.mxu0 0.0
        %623 = vmatprep.subr.mxu0 0.0
        %624 = vmatpush2.msra.mxu0 0.0
        %625 = vmatprep.subr.mxu0 0.0
        %626 = vmatpush2.msra.mxu0 0.0
        %627 = vmatprep.subr.mxu0 0.0
        %628 = vmatpush2.msra.mxu0 0.0
        %629 = vmatprep.subr.mxu0 0.0
        %630 = vmatpush2.msra.mxu0 0.0
        %631 = vmatprep.subr.mxu0 0.0
        %632 = vmatpush2.msra.mxu0 0.0
        %633 = vmatprep.subr.mxu0 0.0
        %634 = vmatpush2.msra.mxu0 0.0
        %635 = vmatprep.subr.mxu0 0.0
        %636 = vmatpush2.msra.mxu0 0.0
        %637 = vmatprep.mubr.f32.mxu0 0.0
        %638 = vmatmul.mubr.f32.gmra.mxu0 %v571
        %v639 = vpop.f32.mrf.mxu0
        %v640 = vadd.f32 0.0, %v639
        %v641 = vpop.f32.mrf.mxu0
        %642 = vdwg.mxu0
        %v643 = vpack.c.bf16 %v640, %v640
        %v644 = vld [vmem:[#allocation8] sm:$0xf]
        %v645 = vld [vmem:[#allocation8 + $0x4] sm:$0xf]
        %v646 = vld [vmem:[#allocation8 + $0x8] sm:$0xf]
        %v647 = vld [vmem:[#allocation8 + $0xc] sm:$0xf]
        %v648 = vld [vmem:[#allocation8 + $0x10] sm:$0xf]
        %v649 = vld [vmem:[#allocation8 + $0x14] sm:$0xf]
        %v650 = vld [vmem:[#allocation8 + $0x18] sm:$0xf]
        %v651 = vld [vmem:[#allocation8 + $0x1c] sm:$0xf]
        %v652 = vld [vmem:[#allocation8 + $0x20] sm:$0xf]
        %v653 = vld [vmem:[#allocation8 + $0x24] sm:$0xf]
        %v654 = vld [vmem:[#allocation8 + $0x28] sm:$0xf]
        %v655 = vld [vmem:[#allocation8 + $0x2c] sm:$0xf]
        %v656 = vld [vmem:[#allocation8 + $0x30] sm:$0xf]
        %v657 = vld [vmem:[#allocation8 + $0x34] sm:$0xf]
        %v658 = vld [vmem:[#allocation8 + $0x38] sm:$0xf]
        %v659 = vld [vmem:[#allocation8 + $0x3c] sm:$0xf]
        %v660 = vld [vmem:[%s5] sm:$0x1]
        %v662 = vlaneseq
        %v663 = vshrl.u32 %v662, 7
        %v664 = vsub.s32 0, %v663
        %v665 = vrot.slane %v660, %v664
        %v683 = vunpack.c.l.b16 %v644
        %v684 = vunpack.c.l.b16 %v645
        %v685 = vunpack.c.l.b16 %v646
        %v686 = vunpack.c.l.b16 %v647
        %v687 = vunpack.c.l.b16 %v648
        %v688 = vunpack.c.l.b16 %v649
        %v689 = vunpack.c.l.b16 %v650
        %v690 = vunpack.c.l.b16 %v651
        %v691 = vunpack.c.l.b16 %v652
        %v692 = vunpack.c.l.b16 %v653
        %v693 = vunpack.c.l.b16 %v654
        %v694 = vunpack.c.l.b16 %v655
        %v695 = vunpack.c.l.b16 %v656
        %v696 = vunpack.c.l.b16 %v657
        %v697 = vunpack.c.l.b16 %v658
        %v698 = vunpack.c.l.b16 %v659
        %v699 = vpack.c.b16 %v684, %v683
        %v700 = vpack.c.b16 %v686, %v685
        %v701 = vpack.c.b16 %v688, %v687
        %v702 = vpack.c.b16 %v690, %v689
        %v703 = vpack.c.b16 %v692, %v691
        %v704 = vpack.c.b16 %v694, %v693
        %v705 = vpack.c.b16 %v696, %v695
        %v706 = vpack.c.b16 %v698, %v697
        %715 = vmatprep.subr.bf16.mxu0 0
        %716 = vmatpush1.bf16.msra.mxu0 %v706
        %717 = vmatprep.subr.bf16.mxu0 0
        %718 = vmatpush1.bf16.msra.mxu0 %v705
        %719 = vmatprep.subr.bf16.mxu0 0
        %720 = vmatpush1.bf16.msra.mxu0 %v704
        %721 = vmatprep.subr.bf16.mxu0 0
        %722 = vmatpush1.bf16.msra.mxu0 %v703
        %723 = vmatprep.subr.bf16.mxu0 0
        %724 = vmatpush1.bf16.msra.mxu0 %v702
        %725 = vmatprep.subr.bf16.mxu0 0
        %726 = vmatpush1.bf16.msra.mxu0 %v701
        %727 = vmatprep.subr.bf16.mxu0 0
        %728 = vmatpush1.bf16.msra.mxu0 %v700
        %729 = vmatprep.subr.bf16.mxu0 0
        %730 = vmatpush1.bf16.msra.mxu0 %v699
        %731 = vmatprep.subr.bf16.mxu0 0
        %732 = vmatpush2.bf16.msra.mxu0 0
        %733 = vmatprep.subr.bf16.mxu0 0
        %734 = vmatpush2.bf16.msra.mxu0 0
        %735 = vmatprep.subr.bf16.mxu0 0
        %736 = vmatpush2.bf16.msra.mxu0 0
        %737 = vmatprep.subr.bf16.mxu0 0
        %738 = vmatpush2.bf16.msra.mxu0 0
        %739 = vmatprep.subr.bf16.mxu0 0
        %740 = vmatpush2.bf16.msra.mxu0 0
        %741 = vmatprep.subr.bf16.mxu0 0
        %742 = vmatpush2.bf16.msra.mxu0 0
        %743 = vmatprep.subr.bf16.mxu0 0
        %744 = vmatpush2.bf16.msra.mxu0 0
        %745 = vmatprep.subr.bf16.mxu0 0
        %746 = vmatpush2.bf16.msra.mxu0 0
        %747 = vmatprep.mubr.bf16.mxu0 0
        %748 = vmatmul.mubr.bf16.gmra.mxu0 %v643
        %v749 = vpop.f32.mrf.mxu0
        %v750 = vadd.f32 %v665, %v749
        %v751 = vpop.f32.mrf.mxu0
        %v752 = vpop.f32.mrf.mxu0
        %v753 = vpop.f32.mrf.mxu0
        %754 = vdwg.mxu0
        %v755 = vmax.f32 %v750, 0.0
        %756 = vst [vmem:[%s332] sm:$0xff] %v755
        %s757 = sand.u32 %s171, 1
        %s758 = scalar_lea.sflag [#allocation4], %s757
        %s759 = sand.u32 %s171, 1
        %s760 = smul.addr %s759, 8
        %s761 = scalar_lea.vmem [#allocation10], %s760
        // Predicated region
        $region61: #{tpu_custom_call.1} parent=43 // pred_check
          %p762 = pneg %p181
        $region62: #{tpu_custom_call.1} parent=43 // pred_check_branch
          %764 = sbr.rel (%p762) target = $region64
        $region63: #{tpu_custom_call.1} parent=43 // pred_region
          %s766 = ssub.s32 128, 128
          %767 = vsyncadd %s758, %s766
          %s768 = smul.addr %s27, 128
          %s769 = scalar_lea.hbm %s6, %s768
          %s771 = sshll.u32 %s761, 4
          %s772 = int_to_ptr.vmem [resolvable:$true] %s771
          %774 = dma.vmem_to_hbm [thread:$0]  %s772, 128, %s769, %s758
        $region64: #{tpu_custom_call.1} parent=43 // pred_fallthru
          _
      $region44: #{tpu_custom_call.1} parent=5 // pred_fallthru
        _
      %p775 = scmp.le.s32.totalorder 2, %s22
      // Predicated region
      $region65: #{tpu_custom_call.1} parent=5 // pred_check
        %p776 = pneg %p775
      $region66: #{tpu_custom_call.1} parent=5 // pred_check_branch
        %778 = sbr.rel (%p776) target = $region68
      $region67: #{tpu_custom_call.1} parent=5 // pred_region
        %s779 = ssub.s32 %s22, 2
        // Predicated region
        $region69: #{tpu_custom_call.1} parent=67 // pred_check
          %p780 = pneg %p187
        $region70: #{tpu_custom_call.1} parent=67 // pred_check_branch
          %782 = sbr.rel (%p780) target = $region72
        $region71: #{tpu_custom_call.1} parent=67 // pred_region
          %s783 = sand.u32 %s172, 1
          %s784 = scalar_lea.sflag [#allocation4], %s783
          %s785 = sand.u32 %s172, 1
          %s786 = smul.addr %s785, 8
          %s787 = scalar_lea.vmem [#allocation10], %s786
          %788 = dma.done %s784, 128
        $region72: #{tpu_custom_call.1} parent=67 // pred_fallthru
          _
      $region68: #{tpu_custom_call.1} parent=5 // pred_fallthru
        _
    $region6: #{tpu_custom_call.1} parent=1 // loop_footer
      %s26 = sadd.s32 1, %s22
    $region7: #{tpu_custom_call.1} parent=1 // loop_footer_branch
      %21 = sbr.rel target = $region3
    $region8: #{tpu_custom_call.1} parent=1 // loop_exit
      _
    %789 = vsyncpa [#allocation3], 1
    %s790 = scalar_lea.sflag [#allocation3], 1
    %791 = vsyncpa %s790, 1
    %792 = vsyncpa [#allocation6], 1
    %s793 = scalar_lea.sflag [#allocation6], 1
    %794 = vsyncpa %s793, 1
    %795 = vsyncpa [#allocation9], 1
    %796 = vsyncpa [#allocation4], 1
    %s797 = scalar_lea.sflag [#allocation4], 1
    %798 = vsyncpa %s797, 1

</llo_original>
